<compile_context>
chip_gen: v7x
topology: tpu7x:2x2x1
jax: 0.10.0
libtpu: 0.0.40
codegen_flags: <defaults>
</compile_context>

<pallas_src>
import functools

import jax
import jax.numpy as jnp
import numpy as np
from jax import lax
from jax.experimental import pallas as pl
from jax.experimental.pallas import tpu as pltpu


def _round_up(v, m):
    return ((v + m - 1) // m) * m


# --------------------------------------------------------------------------
# Kernel A: fused g|h 1x1-conv projection + 2x2 max pooling
# --------------------------------------------------------------------------
def _pooled_proj_kernel(x_ref, w_gh_ref, g_ref, h_ref, *, c, cfp):
    """Grid = (batch, pooled-row chunk); both axes parallel.

    x_ref    : (1, h2c, 2, W/2, 2C) bf16 window view of x. dim 2 = window row
               (dr); the last dim holds [dc=0 channels | dc=1 channels].
    w_gh_ref : (C, Cfp + Chp) bf16 fused g|h weights, zero padded so the g / h
               column groups are 128-lane aligned.
    g_ref    : (1, h2c * W/2, Cfp) bf16 pooled-g output tile.
    h_ref    : (1, h2c * W/2, Chp) bf16 pooled-h output tile.
    """
    w_gh = w_gh_ref[...]
    best = None
    for dr in range(2):                              # 2 window rows
        slab = x_ref[0, :, dr, :, :]                 # (h2c, W/2, 2C) bf16
        rows = slab.shape[0] * slab.shape[1]
        slab2 = slab.reshape(rows, 2 * c)
        for dc in range(2):                          # 2 window cols
            xs = slab2[:, dc * c:(dc + 1) * c]       # (rows, C)
            # exact maxpool2x2(conv1x1(x)): conv each window position, max.
            proj = jnp.dot(xs, w_gh, preferred_element_type=jnp.float32)
            best = proj if best is None else jnp.maximum(best, proj)
    g_ref[0] = best[:, :cfp].astype(g_ref.dtype)     # lane-aligned split
    h_ref[0] = best[:, cfp:].astype(h_ref.dtype)


# --------------------------------------------------------------------------
# Kernel B: attention over the pooled keys/values + output proj + residual
# --------------------------------------------------------------------------
def _attention_kernel(x_ref, g_ref, h_ref, w_f_ref, w_og_ref, out_ref):
    """Grid = (batch, query tile); both axes parallel (no carried state).

    x_ref   : (1, tq, C)     bf16 natural-order NHWC rows (queries + residual)
    g_ref   : (1, HW/4, Cfp) bf16 pooled keys   (resident per batch element)
    h_ref   : (1, HW/4, Chp) bf16 pooled values (resident per batch element)
    w_f_ref : (C, Cfp) bf16;  w_og_ref : (Chp, C) bf16 (gamma folded in)
    out_ref : (1, tq, C) bf16
    """
    xt = x_ref[0]                                               # (tq, C) bf16

    # f = conv1x1(x) for this query tile
    fq = jnp.dot(xt, w_f_ref[...],
                 preferred_element_type=jnp.float32).astype(jnp.bfloat16)

    # attention scores vs pooled keys (contract Cfp; no explicit g transpose)
    s = lax.dot_general(fq, g_ref[0],
                        dimension_numbers=(((1,), (1,)), ((), ())),
                        preferred_element_type=jnp.float32)     # (tq, HW/4)

    # numerically stable softmax; normalization deferred past the value matmul
    s_max = jnp.max(s, axis=-1, keepdims=True)
    p = jnp.exp(s - s_max)
    denom = jnp.sum(p, axis=-1, keepdims=True)                  # (tq, 1)

    att = jnp.dot(p.astype(jnp.bfloat16), h_ref[0],
                  preferred_element_type=jnp.float32)           # (tq, Chp)
    att = att * pl.reciprocal(denom, approx=True)

    # output 1x1 conv (gamma pre-folded into the weight) + residual
    o = jnp.dot(att.astype(jnp.bfloat16), w_og_ref[...],
                preferred_element_type=jnp.float32)             # (tq, C)
    # residual uses the bf16 x already in VMEM (avoids a second f32 x stream);
    # ~2^-9 relative error on the identity path, covered by the tolerance.
    out_ref[0] = (o + xt.astype(jnp.float32)).astype(out_ref.dtype)


# --------------------------------------------------------------------------
# Wrapper
# --------------------------------------------------------------------------
def self_attention_pallas(x_nchw, wf, wg, wh, wo, gamma, *, tq=256):
    """x_nchw: (B, C, H, W) f32; wf/wg/wh/wo are torch-layout (out, in)."""
    B, C, H, W = x_nchw.shape
    assert H % 2 == 0 and W % 2 == 0 and C % 8 == 0 and (H * W) % 8 == 0
    HW, HW4 = H * W, (H * W) // 4
    H2, W2 = H // 2, W // 2
    Cf, Ch = C >> 3, C >> 1
    Cfp, Chp = _round_up(Cf, 128), _round_up(Ch, 128)   # lane-aligned groups
    Kgh = Cfp + Chp

    # query tile: 256 fills the 2x256x256 MXUs on v6e/v7x; must divide HW.
    tq = min(tq, HW)
    while HW % tq:
        tq //= 2
    assert tq >= 8
    n_q = HW // tq

    # Single NCHW->NHWC pass (+ bf16 cast). Everything below is a free
    # reshape of the same buffer (no materialized permutation of x).
    x_nhwc = jnp.transpose(x_nchw, (0, 2, 3, 1)).astype(jnp.bfloat16)
    x_rows = x_nhwc.reshape(B, HW, C)                    # natural query rows
    x_win = x_nhwc.reshape(B, H2, 2, W2, 2 * C)          # 2x2-window view

    # Lane-aligned, zero-padded weights; gamma folded into the output proj.
    w_f_p = jnp.zeros((C, Cfp), jnp.float32).at[:, :Cf].set(wf.T)
    w_g_p = jnp.zeros((C, Cfp), jnp.float32).at[:, :Cf].set(wg.T)
    w_h_p = jnp.zeros((C, Chp), jnp.float32).at[:, :Ch].set(wh.T)
    w_gh_p = jnp.concatenate([w_g_p, w_h_p], axis=1).astype(jnp.bfloat16)
    w_f_p = w_f_p.astype(jnp.bfloat16)
    w_og_p = (jnp.zeros((Chp, C), jnp.float32)
              .at[:Ch, :].set(wo.T * jnp.float32(gamma)).astype(jnp.bfloat16))

    # kernel-A chunking over pooled rows: keep the live f32 projection small.
    max_rows = 1024
    h2_chunk = H2
    for d in range(H2, 0, -1):
        if H2 % d == 0 and d * W2 <= max_rows and (d * W2) % 8 == 0:
            h2_chunk = d
            break
    n_pc = H2 // h2_chunk
    rows_a = h2_chunk * W2

    # VMEM budgets (clamped below the 64 MiB/TC v7x limit).
    est_a = (2 * (h2_chunk * 2 * W2 * 2 * C) * 2      # x window block, dbl-buf
             + 2 * rows_a * Kgh * 2                   # g/h out tiles, dbl-buf
             + 3 * rows_a * Kgh * 4                   # f32 proj / running max
             + 2 * C * Kgh * 2                        # weights
             + (4 << 20))
    est_b = (4 * tq * C * 2                           # x + out tiles, dbl-buf
             + 2 * HW4 * Kgh * 2                      # pooled g/h resident
             + 2 * (C * Cfp + Chp * C) * 2            # weights
             + 6 * tq * HW4 * 4                       # f32 score/exp values
             + 4 * tq * max(Cfp, Chp, C) * 4          # f32 fq/att/o values
             + (4 << 20))
    vmem_a = int(min(max(2 * est_a, 32 << 20), 60 << 20))
    vmem_b = int(min(max(2 * est_b, 32 << 20), 60 << 20))

    # ---- kernel A: pooled g/h (bf16, lane-dense) ------------------------
    g_pool, h_pool = pl.pallas_call(
        functools.partial(_pooled_proj_kernel, c=C, cfp=Cfp),
        out_shape=(jax.ShapeDtypeStruct((B, HW4, Cfp), jnp.bfloat16),
                   jax.ShapeDtypeStruct((B, HW4, Chp), jnp.bfloat16)),
        grid_spec=pltpu.PrefetchScalarGridSpec(
            num_scalar_prefetch=0,
            grid=(B, n_pc),
            in_specs=[
                pl.BlockSpec((1, h2_chunk, 2, W2, 2 * C),
                             lambda b, p: (b, p, 0, 0, 0)),
                pl.BlockSpec((C, Kgh), lambda b, p: (0, 0)),
            ],
            out_specs=[
                pl.BlockSpec((1, rows_a, Cfp), lambda b, p: (b, p, 0)),
                pl.BlockSpec((1, rows_a, Chp), lambda b, p: (b, p, 0)),
            ],
        ),
        compiler_params=pltpu.CompilerParams(
            dimension_semantics=("parallel", "parallel"),
            vmem_limit_bytes=vmem_a,
        ),
    )(x_win, w_gh_p)

    # ---- kernel B: attention + output projection + residual -------------
    out_rows = pl.pallas_call(
        _attention_kernel,
        out_shape=jax.ShapeDtypeStruct((B, HW, C), jnp.bfloat16),
        grid_spec=pltpu.PrefetchScalarGridSpec(
            num_scalar_prefetch=0,
            grid=(B, n_q),
            in_specs=[
                pl.BlockSpec((1, tq, C), lambda b, q: (b, q, 0)),
                pl.BlockSpec((1, HW4, Cfp), lambda b, q: (b, 0, 0)),
                pl.BlockSpec((1, HW4, Chp), lambda b, q: (b, 0, 0)),
                pl.BlockSpec((C, Cfp), lambda b, q: (0, 0)),
                pl.BlockSpec((Chp, C), lambda b, q: (0, 0)),
            ],
            out_specs=pl.BlockSpec((1, tq, C), lambda b, q: (b, q, 0)),
        ),
        compiler_params=pltpu.CompilerParams(
            dimension_semantics=("parallel", "parallel"),
            vmem_limit_bytes=vmem_b,
        ),
    )(x_rows, g_pool, h_pool, w_f_p, w_og_p)

    # single NHWC->NCHW pass on the (bf16) output; callers wanting f32 can
    # cast afterwards (the cast fuses into this transpose).
    out_nhwc = out_rows.reshape(B, H, W, C)
    return jnp.transpose(out_nhwc, (0, 3, 1, 2))


# --------------------------------------------------------------------------
# Host-side helpers (weight preprocessing + pure-JAX reference)
# --------------------------------------------------------------------------
def spectral_normalize(w_mat, key, eps=1e-12):
    """One power-iteration spectral norm (matches nn.utils.spectral_norm
    semantics: W / sigma_est, with a deterministically initialized u)."""
    out_dim, _ = w_mat.shape
    u = jax.random.normal(key, (out_dim,), dtype=w_mat.dtype)
    u = u / (jnp.linalg.norm(u) + eps)
    v = w_mat.T @ u
    v = v / (jnp.linalg.norm(v) + eps)
    u = w_mat @ v
    u = u / (jnp.linalg.norm(u) + eps)
    sigma = u @ (w_mat @ v)
    return w_mat / sigma


def reference_forward(x, wf, wg, wh, wo, gamma):
    """Pure-JAX NCHW f32 reference mirroring the PyTorch forward exactly."""
    B, C, H, W = x.shape
    Cf, Ch = C >> 3, C >> 1

    def conv1x1(t, w):                                      # w: (out, in)
        return jnp.einsum('bchw,oc->bohw', t, w)

    def pool2x2(t):
        Bt, Ct, Ht, Wt = t.shape
        return jnp.max(t.reshape(Bt, Ct, Ht // 2, 2, Wt // 2, 2), axis=(3, 5))

    f = conv1x1(x, wf)
    g = pool2x2(conv1x1(x, wg))
    h = pool2x2(conv1x1(x, wh))
    f = f.reshape(B, Cf, H * W)
    g = g.reshape(B, Cf, (H * W) // 4)
    h = h.reshape(B, Ch, (H * W) // 4)
    beta = jax.nn.softmax(jnp.einsum('bcq,bck->bqk', f, g), axis=-1)
    att = jnp.einsum('bck,bqk->bcq', h, beta).reshape(B, Ch, H, W)
    o = conv1x1(att, wo)
    return gamma * o + x


if __name__ == "__main__":
    key = jax.random.PRNGKey(0)
    B, C, H, W = 2, 32, 16, 16      # num_feat=32 so C>>3=4, C>>1=16
    Cf, Ch = C >> 3, C >> 1

    k_x, k_f, k_g, k_h, k_o, k_uf, k_ug, k_uh, k_uo = jax.random.split(key, 9)
    x = jax.random.normal(k_x, (B, C, H, W), dtype=jnp.float32)

    # 1x1 conv weights, torch layout (out, in), spectral-normalized as in
    # SNConv2d.
    wf = spectral_normalize(
        0.1 * jax.random.normal(k_f, (Cf, C), dtype=jnp.float32), k_uf)
    wg = spectral_normalize(
        0.1 * jax.random.normal(k_g, (Cf, C), dtype=jnp.float32), k_ug)
    wh = spectral_normalize(
        0.1 * jax.random.normal(k_h, (Ch, C), dtype=jnp.float32), k_uh)
    wo = spectral_normalize(
        0.1 * jax.random.normal(k_o, (C, Ch), dtype=jnp.float32), k_uo)

    # nn.Parameter(torch.tensor(0.0)) initializes gamma to 0.0; use a nonzero
    # value so the attention path actually affects the output.
    gamma = 0.5

    out = self_attention_pallas(x, wf, wg, wh, wo, gamma)
    out = jax.block_until_ready(out)

    ref = reference_forward(x, wf, wg, wh, wo, gamma)
    # bf16 operands + bf16 output vs f32 reference -> looser tolerance.
    np.testing.assert_allclose(np.asarray(out.astype(jnp.float32)),
                               np.asarray(ref), rtol=2e-2, atol=2e-2)
    print("KERNEL_OK")
</pallas_src>

<mosaic_0001>
module attributes {stable_mosaic.version = 11 : i64} {
  func.func @_pooled_proj_kernel(%arg0: i32, %arg1: i32, %arg2: memref<1x8x2x8x64xbf16, #tpu.memory_space<vmem>>, %arg3: memref<32x256xbf16, #tpu.memory_space<vmem>>, %arg4: memref<1x64x128xbf16, #tpu.memory_space<vmem>>, %arg5: memref<1x64x128xbf16, #tpu.memory_space<vmem>>) attributes {dimension_semantics = [#tpu.dimension_semantics<parallel>, #tpu.dimension_semantics<parallel>], iteration_bounds = array<i64: 2, 1>, scalar_prefetch = 0 : i64, scratch_operands = 0 : i64, tpu.core_type = #tpu.core_type<tc>, window_params = [{transform_indices = @transform_0, window_bounds = array<i64: 1, 8, 2, 8, 64>}, {pipeline_mode = #tpu.pipeline_mode<synchronous>, transform_indices = @transform_1, window_bounds = array<i64: 32, 256>}, {transform_indices = @transform_2, window_bounds = array<i64: 1, 64, 128>}, {transform_indices = @transform_3, window_bounds = array<i64: 1, 64, 128>}]} {
    %c0 = arith.constant 0 : index
    %c0_0 = arith.constant 0 : index
    %0 = vector.load %arg3[%c0, %c0_0] : memref<32x256xbf16, #tpu.memory_space<vmem>>, vector<32x256xbf16>
    %c0_1 = arith.constant 0 : index
    %c0_2 = arith.constant 0 : index
    %c0_3 = arith.constant 0 : index
    %c0_4 = arith.constant 0 : index
    %c0_5 = arith.constant 0 : index
    %1 = vector.load %arg2[%c0_1, %c0_2, %c0_3, %c0_4, %c0_5] : memref<1x8x2x8x64xbf16, #tpu.memory_space<vmem>>, vector<1x8x1x8x64xbf16>
    %2 = vector.shape_cast %1 : vector<1x8x1x8x64xbf16> to vector<8x8x64xbf16>
    %3 = vector.shape_cast %2 : vector<8x8x64xbf16> to vector<64x64xbf16>
    %4 = vector.extract_strided_slice %3 {offsets = [0, 0], sizes = [64, 32], strides = [1, 1]} : vector<64x64xbf16> to vector<64x32xbf16>
    %cst = arith.constant dense<0.000000e+00> : vector<64x256xf32>
    %5 = tpu.matmul %4, %0, %cst {dimension_numbers = #tpu.dot_dimension_numbers<[1], [0], [0], [1], [0, 0, 1, 1], [], []>} : vector<64x32xbf16>, vector<32x256xbf16>, vector<64x256xf32> -> vector<64x256xf32>
    %6 = vector.extract_strided_slice %3 {offsets = [0, 32], sizes = [64, 32], strides = [1, 1]} : vector<64x64xbf16> to vector<64x32xbf16>
    %cst_6 = arith.constant dense<0.000000e+00> : vector<64x256xf32>
    %7 = tpu.matmul %6, %0, %cst_6 {dimension_numbers = #tpu.dot_dimension_numbers<[1], [0], [0], [1], [0, 0, 1, 1], [], []>} : vector<64x32xbf16>, vector<32x256xbf16>, vector<64x256xf32> -> vector<64x256xf32>
    %8 = arith.maximumf %5, %7 : vector<64x256xf32>
    %c0_7 = arith.constant 0 : index
    %c0_8 = arith.constant 0 : index
    %c1 = arith.constant 1 : index
    %c0_9 = arith.constant 0 : index
    %c0_10 = arith.constant 0 : index
    %9 = vector.load %arg2[%c0_7, %c0_8, %c1, %c0_9, %c0_10] : memref<1x8x2x8x64xbf16, #tpu.memory_space<vmem>>, vector<1x8x1x8x64xbf16>
    %10 = vector.shape_cast %9 : vector<1x8x1x8x64xbf16> to vector<8x8x64xbf16>
    %11 = vector.shape_cast %10 : vector<8x8x64xbf16> to vector<64x64xbf16>
    %12 = vector.extract_strided_slice %11 {offsets = [0, 0], sizes = [64, 32], strides = [1, 1]} : vector<64x64xbf16> to vector<64x32xbf16>
    %cst_11 = arith.constant dense<0.000000e+00> : vector<64x256xf32>
    %13 = tpu.matmul %12, %0, %cst_11 {dimension_numbers = #tpu.dot_dimension_numbers<[1], [0], [0], [1], [0, 0, 1, 1], [], []>} : vector<64x32xbf16>, vector<32x256xbf16>, vector<64x256xf32> -> vector<64x256xf32>
    %14 = arith.maximumf %8, %13 : vector<64x256xf32>
    %15 = vector.extract_strided_slice %11 {offsets = [0, 32], sizes = [64, 32], strides = [1, 1]} : vector<64x64xbf16> to vector<64x32xbf16>
    %cst_12 = arith.constant dense<0.000000e+00> : vector<64x256xf32>
    %16 = tpu.matmul %15, %0, %cst_12 {dimension_numbers = #tpu.dot_dimension_numbers<[1], [0], [0], [1], [0, 0, 1, 1], [], []>} : vector<64x32xbf16>, vector<32x256xbf16>, vector<64x256xf32> -> vector<64x256xf32>
    %17 = arith.maximumf %14, %16 : vector<64x256xf32>
    %18 = vector.extract_strided_slice %17 {offsets = [0, 0], sizes = [64, 128], strides = [1, 1]} : vector<64x256xf32> to vector<64x128xf32>
    %19 = arith.truncf %18 : vector<64x128xf32> to vector<64x128xbf16>
    %c0_13 = arith.constant 0 : index
    %c0_14 = arith.constant 0 : index
    %c0_15 = arith.constant 0 : index
    %20 = vector.load %arg4[%c0_13, %c0_14, %c0_15] : memref<1x64x128xbf16, #tpu.memory_space<vmem>>, vector<1x64x128xbf16>
    %21 = vector.shape_cast %20 : vector<1x64x128xbf16> to vector<64x128xbf16>
    %22 = vector.shape_cast %19 : vector<64x128xbf16> to vector<1x64x128xbf16>
    tpu.vector_store %arg4[%c0_13, %c0_14, %c0_15], %22 {strides = array<i32>} : memref<1x64x128xbf16, #tpu.memory_space<vmem>>, vector<1x64x128xbf16>,
    %23 = vector.extract_strided_slice %17 {offsets = [0, 128], sizes = [64, 128], strides = [1, 1]} : vector<64x256xf32> to vector<64x128xf32>
    %24 = arith.truncf %23 : vector<64x128xf32> to vector<64x128xbf16>
    %c0_16 = arith.constant 0 : index
    %c0_17 = arith.constant 0 : index
    %c0_18 = arith.constant 0 : index
    %25 = vector.load %arg5[%c0_16, %c0_17, %c0_18] : memref<1x64x128xbf16, #tpu.memory_space<vmem>>, vector<1x64x128xbf16>
    %26 = vector.shape_cast %25 : vector<1x64x128xbf16> to vector<64x128xbf16>
    %27 = vector.shape_cast %24 : vector<64x128xbf16> to vector<1x64x128xbf16>
    tpu.vector_store %arg5[%c0_16, %c0_17, %c0_18], %27 {strides = array<i32>} : memref<1x64x128xbf16, #tpu.memory_space<vmem>>, vector<1x64x128xbf16>,
    return
  }
  func.func @transform_0(%arg0: i32, %arg1: i32) -> (i32, i32, i32, i32, i32) {
    %c0_i32 = arith.constant 0 : i32
    %c0_i32_0 = arith.constant 0 : i32
    %c0_i32_1 = arith.constant 0 : i32
    %c0_i32_2 = arith.constant 0 : i32
    return %arg0, %arg1, %c0_i32, %c0_i32_0, %c0_i32_1 : i32, i32, i32, i32, i32
  }
  func.func @transform_1(%arg0: i32, %arg1: i32) -> (i32, i32) {
    %c0_i32 = arith.constant 0 : i32
    %c0_i32_0 = arith.constant 0 : i32
    %c0_i32_1 = arith.constant 0 : i32
    return %c0_i32, %c0_i32_0 : i32, i32
  }
  func.func @transform_2(%arg0: i32, %arg1: i32) -> (i32, i32, i32) {
    %c0_i32 = arith.constant 0 : i32
    %c0_i32_0 = arith.constant 0 : i32
    return %arg0, %arg1, %c0_i32 : i32, i32, i32
  }
  func.func @transform_3(%arg0: i32, %arg1: i32) -> (i32, i32, i32) {
    %c0_i32 = arith.constant 0 : i32
    %c0_i32_0 = arith.constant 0 : i32
    return %arg0, %arg1, %c0_i32 : i32, i32, i32
  }
}

</mosaic_0001>

<llo_original>
// kernel: tpu_custom_call.1
$region0: #{tpu_custom_call.1}
  #allocation0 [shape = 'u32[]', space=smem, size = 0x4, offset = 0x4, fixed_abs, tag = 'smem constant byte address 0x4 - core index']
  #allocation1 [shape = 'u32[144,128]{1,0:T(1,128)}', space=vmem, size = 0x12000, scoped, tag = 'internal scratch']
  %s0 = inlined_call_operand.hbm [shape: bf16[2,8,2,8,64], index: 0, kind: input, shape index: {}]
  %s1 = inlined_call_operand.hbm [shape: bf16[32,256], index: 1, kind: input, shape index: {}]
  %s2 = inlined_call_operand.hbm [shape: bf16[2,64,128], index: 2, kind: output, shape index: {0}]
  %s3 = inlined_call_operand.hbm [shape: bf16[2,64,128], index: 3, kind: output, shape index: {1}]
  %4 = xla_tuple %s2, %s3
  %s5 = sld [smem:[#allocation0]]
  $region57: #{tpu_custom_call.1} parent=0
    _
  %s7 = ssub.s32 1, %s5
  %s8 = scalar_select 0, %s7, %s5
  $region1: #{tpu_custom_call.1} parent=0
    #allocation2 [shape = 'u8[65536]{0}', space=vmem, size = 0x10000, scoped, tag = 'input window, operand 0']
    #allocation3 [shape = 's32[2]{0}', space=sflag, size = 0x8, scoped, tag = 'scoped memory for tpu_custom_call.1']
    #allocation4 [shape = 's32[2]{0}', space=sflag, size = 0x8, scoped, tag = 'scoped memory for tpu_custom_call.1']
    #allocation5 [shape = 'u8[16384]{0}', space=vmem, size = 0x4000, scoped, tag = 'input window, operand 1, single buffered']
    #allocation6 [shape = 's32[1]{0}', space=sflag, size = 0x4, scoped, tag = 'scoped memory for tpu_custom_call.1']
    #allocation7 [shape = 'u8[32768]{0}', space=vmem, size = 0x8000, scoped, tag = 'output window, operand 0']
    #allocation8 [shape = 'u8[32768]{0}', space=vmem, size = 0x8000, scoped, tag = 'output window, operand 1']
    #allocation9 [shape = 's32[2]{0}', space=sflag, size = 0x8, scoped, tag = 'scoped memory for tpu_custom_call.1']
    %9 = vsyncpa [#allocation3], 0
    %s10 = scalar_lea.sflag [#allocation3], 1
    %11 = vsyncpa %s10, 0
    %12 = vsyncpa [#allocation6], 0
    %13 = vsyncpa [#allocation4], 0
    %s14 = scalar_lea.sflag [#allocation4], 1
    %15 = vsyncpa %s14, 0
    %16 = vsyncpa [#allocation9], 0
    %s17 = scalar_lea.sflag [#allocation9], 1
    %18 = vsyncpa %s17, 0
    loop: start=0, step=1, limit=4
    $region2: #{tpu_custom_call.1} parent=1 // loop_pre_header
      _
    $region3: #{tpu_custom_call.1} parent=1 // loop_header
      %s20 = sphi 0, %s24
      %p21 = scmp.ge.s32.totalorder %s20, 4
      %s27 = sphi 0, %s39
      %s28 = sphi 0, %s35
      %s29 = sphi 0, %s27
      %s30 = sphi 0, %s28
      %s31 = sphi 0, %s29
      %s32 = sphi 0, %s30
      %s44 = sphi 0, %s46
      %s47 = sphi 0, %s44
      %s48 = sphi 0, %s47
      %s64 = sphi 0, %s48
      %s68 = sphi 0, %s68
      %s70 = sphi 0, %s68
      %s71 = sphi 0, %s70
      %s85 = sphi 0, %s71
      %s93 = sphi 0, %s95
      %s96 = sphi 0, %s93
      %s97 = sphi 0, %s96
      %s113 = sphi 0, %s97
      %s121 = sphi 0, %s123
      %s124 = sphi 0, %s121
      %s125 = sphi 0, %s124
      %s141 = sphi 0, %s125
    $region4: #{tpu_custom_call.1} parent=1 // loop_header_branch
      %23 = sbr.rel (%p21) target = $region8
    $region5: #{tpu_custom_call.1} parent=1 // loop_body
      %s25 = ssub.s32 %s20, 1
      %s26 = ssub.s32 %s20, 2
      %s33 = sadd.s32 1, %s28
      %p34 = scmp.ge.s32.totalorder %s33, 1
      %s35 = scalar_select %p34, 0, %s33
      %s36 = sadd.s32 1, %s27
      %s37 = scalar_select %p34, %s36, %s27
      %p38 = scmp.ge.s32.totalorder %s37, 2
      %s39 = scalar_select %p38, 0, %s37
      %s40 = ssub.s32 %s27, %s39
      %s41 = ssub.s32 %s28, %s35
      %s42 = sor.u32 %s40, %s41
      %p43 = scmp.eq.s32.totalorder %s42, 0
      %s45 = sadd.s32 %s44, 1
      %s46 = scalar_select %p43, %s44, %s45
      %p49 = pneg %p43
      %p50 = scmp.eq.s32.totalorder %s20, 1
      %p51 = por %p49, %p50
      %p52 = scmp.ne.s32.totalorder %s44, %s47
      %p53 = scmp.eq.s32.totalorder %s20, 0
      %p54 = por %p52, %p53
      %p55 = scmp.ne.s32.totalorder %s44, %s47
      %p56 = scmp.eq.s32.totalorder %s25, 1
      %p57 = por %p55, %p56
      %p58 = scmp.ne.s32.totalorder %s47, %s48
      %p59 = scmp.eq.s32.totalorder %s25, 0
      %p60 = por %p58, %p59
      %p61 = scmp.ne.s32.totalorder %s47, %s48
      %p62 = scmp.eq.s32.totalorder %s26, 1
      %p63 = por %p61, %p62
      %p65 = scmp.ne.s32.totalorder %s48, %s64
      %p66 = scmp.eq.s32.totalorder %s26, 0
      %p67 = por %p65, %p66
      %s69 = sadd.s32 %s68, 1
      %p72 = scmp.eq.s32.totalorder %s20, 1
      %p73 = scmp.ne.s32.totalorder %s68, %s70
      %p74 = scmp.eq.s32.totalorder %s20, 0
      %p75 = por %p73, %p74
      %p76 = scmp.ne.s32.totalorder %s68, %s70
      %p77 = scmp.eq.s32.totalorder %s25, 1
      %p78 = por %p76, %p77
      %p79 = scmp.ne.s32.totalorder %s70, %s71
      %p80 = scmp.eq.s32.totalorder %s25, 0
      %p81 = por %p79, %p80
      %p82 = scmp.ne.s32.totalorder %s70, %s71
      %p83 = scmp.eq.s32.totalorder %s26, 1
      %p84 = por %p82, %p83
      %p86 = scmp.ne.s32.totalorder %s71, %s85
      %p87 = scmp.eq.s32.totalorder %s26, 0
      %p88 = por %p86, %p87
      %s89 = ssub.s32 %s27, %s39
      %s90 = ssub.s32 %s28, %s35
      %s91 = sor.u32 %s89, %s90
      %p92 = scmp.eq.s32.totalorder %s91, 0
      %s94 = sadd.s32 %s93, 1
      %s95 = scalar_select %p92, %s93, %s94
      %p98 = pneg %p92
      %p99 = scmp.eq.s32.totalorder %s20, 1
      %p100 = por %p98, %p99
      %p101 = scmp.ne.s32.totalorder %s93, %s96
      %p102 = scmp.eq.s32.totalorder %s20, 0
      %p103 = por %p101, %p102
      %p104 = scmp.ne.s32.totalorder %s93, %s96
      %p105 = scmp.eq.s32.totalorder %s25, 1
      %p106 = por %p104, %p105
      %p107 = scmp.ne.s32.totalorder %s96, %s97
      %p108 = scmp.eq.s32.totalorder %s25, 0
      %p109 = por %p107, %p108
      %p110 = scmp.ne.s32.totalorder %s96, %s97
      %p111 = scmp.eq.s32.totalorder %s26, 1
      %p112 = por %p110, %p111
      %p114 = scmp.ne.s32.totalorder %s97, %s113
      %p115 = scmp.eq.s32.totalorder %s26, 0
      %p116 = por %p114, %p115
      %s117 = ssub.s32 %s27, %s39
      %s118 = ssub.s32 %s28, %s35
      %s119 = sor.u32 %s117, %s118
      %p120 = scmp.eq.s32.totalorder %s119, 0
      %s122 = sadd.s32 %s121, 1
      %s123 = scalar_select %p120, %s121, %s122
      %p126 = pneg %p120
      %p127 = scmp.eq.s32.totalorder %s20, 1
      %p128 = por %p126, %p127
      %p129 = scmp.ne.s32.totalorder %s121, %s124
      %p130 = scmp.eq.s32.totalorder %s20, 0
      %p131 = por %p129, %p130
      %p132 = scmp.ne.s32.totalorder %s121, %s124
      %p133 = scmp.eq.s32.totalorder %s25, 1
      %p134 = por %p132, %p133
      %p135 = scmp.ne.s32.totalorder %s124, %s125
      %p136 = scmp.eq.s32.totalorder %s25, 0
      %p137 = por %p135, %p136
      %p138 = scmp.ne.s32.totalorder %s124, %s125
      %p139 = scmp.eq.s32.totalorder %s26, 1
      %p140 = por %p138, %p139
      %p142 = scmp.ne.s32.totalorder %s125, %s141
      %p143 = scmp.eq.s32.totalorder %s26, 0
      %p144 = por %p142, %p143
      %p145 = scmp.le.s32.totalorder 1, %s20
      %p146 = scmp.lt.s32.totalorder %s20, 3
      %p147 = pnand %p145, %p146
      %p148 = pneg %p147
      // Predicated region
      $region9: #{tpu_custom_call.1} parent=5 // pred_check
        _
      $region10: #{tpu_custom_call.1} parent=5 // pred_check_branch
        %150 = sbr.rel (%p147) target = $region12
      $region11: #{tpu_custom_call.1} parent=5 // pred_region
        %s151 = ssub.s32 %s20, 1
        // Predicated region
        $region13: #{tpu_custom_call.1} parent=11 // pred_check
          %p152 = pneg %p81
        $region14: #{tpu_custom_call.1} parent=11 // pred_check_branch
          %154 = sbr.rel (%p152) target = $region16
        $region15: #{tpu_custom_call.1} parent=11 // pred_region
          %s156 = ssub.s32 512, 512
          %157 = vsyncadd [#allocation6], %s156
          %s158 = sshll.u32 [#allocation5], 4
          %s159 = int_to_ptr.vmem [resolvable:$true] %s158
          %164 = dma.hbm_to_vmem [thread:$0]  %s1, 512, %s159, [#allocation6], 128, 128, 8
        $region16: #{tpu_custom_call.1} parent=11 // pred_fallthru
          _
      $region12: #{tpu_custom_call.1} parent=5 // pred_fallthru
        _
      %p165 = scmp.lt.s32.totalorder %s20, 2
      // Predicated region
      $region17: #{tpu_custom_call.1} parent=5 // pred_check
        %p166 = pneg %p165
      $region18: #{tpu_custom_call.1} parent=5 // pred_check_branch
        %168 = sbr.rel (%p166) target = $region20
      $region19: #{tpu_custom_call.1} parent=5 // pred_region
        // Predicated region
        $region21: #{tpu_custom_call.1} parent=19 // pred_check
          %p169 = pneg %p54
        $region22: #{tpu_custom_call.1} parent=19 // pred_check_branch
          %171 = sbr.rel (%p169) target = $region24
        $region23: #{tpu_custom_call.1} parent=19 // pred_region
          %s172 = sand.u32 %s44, 1
          %s173 = scalar_lea.sflag [#allocation3], %s172
          %s174 = sand.u32 %s44, 1
          %s175 = smul.addr %s174, 64
          %s176 = scalar_lea.vmem [#allocation2], %s175
          %s177 = smul.u32 8, %s28
          %s179 = ssub.s32 1024, 1024
          %180 = vsyncadd %s173, %s179
          %s181 = smul.addr %s177, 2
          %s182 = smul.addr %s27, 16
          %s183 = sadd.s32 %s181, %s182
          %s184 = smul.addr %s183, 64
          %s185 = scalar_lea.hbm %s0, %s184
          %s186 = sshll.u32 %s176, 4
          %s187 = int_to_ptr.vmem [resolvable:$true] %s186
          %192 = dma.hbm_to_vmem [thread:$0]  %s185, 1024, %s187, %s173, 64, 64, 4
        $region24: #{tpu_custom_call.1} parent=19 // pred_fallthru
          _
      $region20: #{tpu_custom_call.1} parent=5 // pred_fallthru
        _
      %p193 = scmp.le.s32.totalorder 1, %s20
      %p194 = scmp.lt.s32.totalorder %s20, 3
      %p195 = pnand %p193, %p194
      %p196 = pneg %p195
      // Predicated region
      $region25: #{tpu_custom_call.1} parent=5 // pred_check
        _
      $region26: #{tpu_custom_call.1} parent=5 // pred_check_branch
        %198 = sbr.rel (%p195) target = $region28
      $region27: #{tpu_custom_call.1} parent=5 // pred_region
        %s199 = ssub.s32 %s20, 1
        %s200 = sand.u32 %s47, 1
        %s201 = scalar_lea.sflag [#allocation3], %s200
        %s202 = sand.u32 %s47, 1
        %s203 = smul.addr %s202, 64
        %s204 = scalar_lea.vmem [#allocation2], %s203
        // Predicated region
        $region29: #{tpu_custom_call.1} parent=27 // pred_check
          %p205 = pneg %p60
        $region30: #{tpu_custom_call.1} parent=27 // pred_check_branch
          %207 = sbr.rel (%p205) target = $region32
        $region31: #{tpu_custom_call.1} parent=27 // pred_region
          %208 = dma.done %s201, 1024
        $region32: #{tpu_custom_call.1} parent=27 // pred_fallthru
          _
        // Predicated region
        $region33: #{tpu_custom_call.1} parent=27 // pred_check
          %p209 = pneg %p81
        $region34: #{tpu_custom_call.1} parent=27 // pred_check_branch
          %211 = sbr.rel (%p209) target = $region36
        $region35: #{tpu_custom_call.1} parent=27 // pred_region
          %212 = dma.done [#allocation6], 512
        $region36: #{tpu_custom_call.1} parent=27 // pred_fallthru
          _
        %s213 = sand.u32 %s47, 1
        %s214 = scalar_lea.sflag [#allocation3], %s213
        %s215 = sand.u32 %s47, 1
        %s216 = smul.addr %s215, 64
        %s217 = scalar_lea.vmem [#allocation2], %s216
        %p218 = pneg %p60
        %p219 = pneg %p57
        %p220 = pneg %p81
        %p221 = pneg %p78
        %p222 = pneg %p109
        %p223 = pneg %p106
        %s224 = sand.u32 %s96, 1
        %s225 = scalar_lea.sflag [#allocation4], %s224
        %s226 = sand.u32 %s96, 1
        %s227 = smul.addr %s226, 32
        %s228 = scalar_lea.vmem [#allocation7], %s227
        %p229 = pneg %p137
        %p230 = pneg %p134
        %s231 = sand.u32 %s124, 1
        %s232 = scalar_lea.sflag [#allocation9], %s231
        %s233 = sand.u32 %s124, 1
        %s234 = smul.addr %s233, 32
        %s235 = scalar_lea.vmem [#allocation8], %s234
        %s236 = smul.u32 8, %s30
        %s237 = smul.u32 8, %s30
        %s238 = smul.u32 8, %s30
        %v240 = vld [vmem:[#allocation5] sm:$0xff]
        %v241 = vld [vmem:[#allocation5 + $0x8] sm:$0xff]
        %v242 = vld [vmem:[#allocation5 + $0x10] sm:$0xff]
        %v243 = vld [vmem:[#allocation5 + $0x18] sm:$0xff]
        %v244 = vld [vmem:[%s204] sm:$0xf]
        %v245 = vld [vmem:[%s204 + $0x8] sm:$0xf]
        %v246 = vld [vmem:[%s204 + $0x10] sm:$0xf]
        %v247 = vld [vmem:[%s204 + $0x18] sm:$0xf]
        %v248 = vld [vmem:[%s204 + $0x20] sm:$0xf]
        %v249 = vld [vmem:[%s204 + $0x28] sm:$0xf]
        %v250 = vld [vmem:[%s204 + $0x30] sm:$0xf]
        %v251 = vld [vmem:[%s204 + $0x38] sm:$0xf]
        %v260 = vunpack.c.l.b16 %v244
        %v261 = vunpack.c.l.b16 %v245
        %v262 = vunpack.c.l.b16 %v246
        %v263 = vunpack.c.l.b16 %v247
        %v264 = vunpack.c.l.b16 %v248
        %v265 = vunpack.c.l.b16 %v249
        %v266 = vunpack.c.l.b16 %v250
        %v267 = vunpack.c.l.b16 %v251
        %v268 = vpack.c.b16 %v261, %v260
        %v269 = vpack.c.b16 %v263, %v262
        %v270 = vpack.c.b16 %v265, %v264
        %v271 = vpack.c.b16 %v267, %v266
        %v276 = vunpack.c.l.b16 %v240
        %v277 = vunpack.c.h.b16 %v240
        %v278 = vunpack.c.l.b16 %v241
        %v279 = vunpack.c.h.b16 %v241
        %v280 = vunpack.c.l.b16 %v242
        %v281 = vunpack.c.h.b16 %v242
        %v282 = vunpack.c.l.b16 %v243
        %v283 = vunpack.c.h.b16 %v243
        %v284 = vpack.c.b16 %v278, %v276
        %v285 = vpack.c.b16 %v279, %v277
        %v286 = vpack.c.b16 %v282, %v280
        %v287 = vpack.c.b16 %v283, %v281
        %vm292 = vcmask 261120
        %v294 = vsel %vm292, %v268, 0
        %v297 = vsel %vm292, %v269, 0
        %v300 = vsel %vm292, %v270, 0
        %v303 = vsel %vm292, %v271, 0
        %305 = vmatprep.subr.bf16.mxu0 %v285
        %306 = vmatpush1.bf16.msra.mxu0 %v284
        %307 = vmatprep.subr.bf16.mxu0 %v287
        %308 = vmatpush1.bf16.msra.mxu0 %v286
        %309 = vmatprep.subr.bf16.mxu0 0
        %310 = vmatpush1.bf16.msra.mxu0 0
        %311 = vmatprep.subr.bf16.mxu0 0
        %312 = vmatpush1.bf16.msra.mxu0 0
        %313 = vmatprep.subr.bf16.mxu0 0
        %314 = vmatpush1.bf16.msra.mxu0 0
        %315 = vmatprep.subr.bf16.mxu0 0
        %316 = vmatpush1.bf16.msra.mxu0 0
        %317 = vmatprep.subr.bf16.mxu0 0
        %318 = vmatpush1.bf16.msra.mxu0 0
        %319 = vmatprep.subr.bf16.mxu0 0
        %320 = vmatpush1.bf16.msra.mxu0 0
        %321 = vmatprep.subr.bf16.mxu0 0
        %322 = vmatpush1.bf16.msra.mxu0 0
        %323 = vmatprep.subr.bf16.mxu0 0
        %324 = vmatpush1.bf16.msra.mxu0 0
        %325 = vmatprep.subr.bf16.mxu0 0
        %326 = vmatpush1.bf16.msra.mxu0 0
        %327 = vmatprep.subr.bf16.mxu0 0
        %328 = vmatpush1.bf16.msra.mxu0 0
        %329 = vmatprep.subr.bf16.mxu0 0
        %330 = vmatpush1.bf16.msra.mxu0 0
        %331 = vmatprep.subr.bf16.mxu0 0
        %332 = vmatpush1.bf16.msra.mxu0 0
        %333 = vmatprep.subr.bf16.mxu0 0
        %334 = vmatpush1.bf16.msra.mxu0 0
        %335 = vmatprep.subr.bf16.mxu0 0
        %336 = vmatpush1.bf16.msra.mxu0 0
        %337 = vmatprep.mubr.bf16.mxu0 0
        %338 = vmatmul.mubr.bf16.gmra.mrb[0].mxu0 %v294
        %v339 = vpop.f32.mrb[0].mxu0
        %v340 = vadd.f32 0.0, %v339
        %v341 = vpop.f32.mrb[0].mxu0
        %v342 = vadd.f32 0.0, %v341
        %v343 = vpop.f32.mrb[0].mxu0
        %v344 = vadd.f32 0.0, %v343
        %v345 = vpop.f32.mrb[0].mxu0
        %v346 = vadd.f32 0.0, %v345
        %347 = vmatprep.mubr.bf16.mxu0 0
        %348 = vmatmul.mubr.bf16.gmra.mrb[0].mxu0 %v297
        %v349 = vpop.f32.mrb[0].mxu0
        %v350 = vadd.f32 0.0, %v349
        %v351 = vpop.f32.mrb[0].mxu0
        %v352 = vadd.f32 0.0, %v351
        %v353 = vpop.f32.mrb[0].mxu0
        %v354 = vadd.f32 0.0, %v353
        %v355 = vpop.f32.mrb[0].mxu0
        %v356 = vadd.f32 0.0, %v355
        %357 = vmatprep.mubr.bf16.mxu0 0
        %358 = vmatmul.mubr.bf16.gmra.mrb[0].mxu0 %v300
        %v359 = vpop.f32.mrb[0].mxu0
        %v360 = vadd.f32 0.0, %v359
        %v361 = vpop.f32.mrb[0].mxu0
        %v362 = vadd.f32 0.0, %v361
        %v363 = vpop.f32.mrb[0].mxu0
        %v364 = vadd.f32 0.0, %v363
        %v365 = vpop.f32.mrb[0].mxu0
        %v366 = vadd.f32 0.0, %v365
        %367 = vmatprep.mubr.bf16.mxu0 0
        %368 = vmatmul.mubr.bf16.gmra.mrb[0].mxu0 %v303
        %v369 = vpop.f32.mrb[0].mxu0
        %v370 = vadd.f32 0.0, %v369
        %v371 = vpop.f32.mrb[0].mxu0
        %v372 = vadd.f32 0.0, %v371
        %v373 = vpop.f32.mrb[0].mxu0
        %v374 = vadd.f32 0.0, %v373
        %v375 = vpop.f32.mrb[0].mxu0
        %v376 = vadd.f32 0.0, %v375
        %377 = vdwg.mxu0
        %378 = vrot.lane.b32.xlu0 %v268, 96
        %v379 = vpop.permute.xlu0 %378
        %380 = vrot.lane.b32.xlu0 %v269, 96
        %v381 = vpop.permute.xlu0 %380
        %382 = vrot.lane.b32.xlu0 %v270, 96
        %v383 = vpop.permute.xlu0 %382
        %384 = vrot.lane.b32.xlu0 %v271, 96
        %v385 = vpop.permute.xlu0 %384
        %v387 = vsel %vm292, %v379, 0
        %v390 = vsel %vm292, %v381, 0
        %v393 = vsel %vm292, %v383, 0
        %v396 = vsel %vm292, %v385, 0
        %398 = vmatprep.subr.bf16.mxu0 %v285
        %399 = vmatpush1.bf16.msra.mxu0 %v284
        %400 = vmatprep.subr.bf16.mxu0 %v287
        %401 = vmatpush1.bf16.msra.mxu0 %v286
        %402 = vmatprep.subr.bf16.mxu0 0
        %403 = vmatpush1.bf16.msra.mxu0 0
        %404 = vmatprep.subr.bf16.mxu0 0
        %405 = vmatpush1.bf16.msra.mxu0 0
        %406 = vmatprep.subr.bf16.mxu0 0
        %407 = vmatpush1.bf16.msra.mxu0 0
        %408 = vmatprep.subr.bf16.mxu0 0
        %409 = vmatpush1.bf16.msra.mxu0 0
        %410 = vmatprep.subr.bf16.mxu0 0
        %411 = vmatpush1.bf16.msra.mxu0 0
        %412 = vmatprep.subr.bf16.mxu0 0
        %413 = vmatpush1.bf16.msra.mxu0 0
        %414 = vmatprep.subr.bf16.mxu0 0
        %415 = vmatpush1.bf16.msra.mxu0 0
        %416 = vmatprep.subr.bf16.mxu0 0
        %417 = vmatpush1.bf16.msra.mxu0 0
        %418 = vmatprep.subr.bf16.mxu0 0
        %419 = vmatpush1.bf16.msra.mxu0 0
        %420 = vmatprep.subr.bf16.mxu0 0
        %421 = vmatpush1.bf16.msra.mxu0 0
        %422 = vmatprep.subr.bf16.mxu0 0
        %423 = vmatpush1.bf16.msra.mxu0 0
        %424 = vmatprep.subr.bf16.mxu0 0
        %425 = vmatpush1.bf16.msra.mxu0 0
        %426 = vmatprep.subr.bf16.mxu0 0
        %427 = vmatpush1.bf16.msra.mxu0 0
        %428 = vmatprep.subr.bf16.mxu0 0
        %429 = vmatpush1.bf16.msra.mxu0 0
        %430 = vmatprep.mubr.bf16.mxu0 0
        %431 = vmatmul.mubr.bf16.gmra.mrb[0].mxu0 %v387
        %v432 = vpop.f32.mrb[0].mxu0
        %v433 = vadd.f32 0.0, %v432
        %v434 = vpop.f32.mrb[0].mxu0
        %v435 = vadd.f32 0.0, %v434
        %v436 = vpop.f32.mrb[0].mxu0
        %v437 = vadd.f32 0.0, %v436
        %v438 = vpop.f32.mrb[0].mxu0
        %v439 = vadd.f32 0.0, %v438
        %440 = vmatprep.mubr.bf16.mxu0 0
        %441 = vmatmul.mubr.bf16.gmra.mrb[0].mxu0 %v390
        %v442 = vpop.f32.mrb[0].mxu0
        %v443 = vadd.f32 0.0, %v442
        %v444 = vpop.f32.mrb[0].mxu0
        %v445 = vadd.f32 0.0, %v444
        %v446 = vpop.f32.mrb[0].mxu0
        %v447 = vadd.f32 0.0, %v446
        %v448 = vpop.f32.mrb[0].mxu0
        %v449 = vadd.f32 0.0, %v448
        %450 = vmatprep.mubr.bf16.mxu0 0
        %451 = vmatmul.mubr.bf16.gmra.mrb[0].mxu0 %v393
        %v452 = vpop.f32.mrb[0].mxu0
        %v453 = vadd.f32 0.0, %v452
        %v454 = vpop.f32.mrb[0].mxu0
        %v455 = vadd.f32 0.0, %v454
        %v456 = vpop.f32.mrb[0].mxu0
        %v457 = vadd.f32 0.0, %v456
        %v458 = vpop.f32.mrb[0].mxu0
        %v459 = vadd.f32 0.0, %v458
        %460 = vmatprep.mubr.bf16.mxu0 0
        %461 = vmatmul.mubr.bf16.gmra.mrb[0].mxu0 %v396
        %v462 = vpop.f32.mrb[0].mxu0
        %v463 = vadd.f32 0.0, %v462
        %v464 = vpop.f32.mrb[0].mxu0
        %v465 = vadd.f32 0.0, %v464
        %v466 = vpop.f32.mrb[0].mxu0
        %v467 = vadd.f32 0.0, %v466
        %v468 = vpop.f32.mrb[0].mxu0
        %v469 = vadd.f32 0.0, %v468
        %470 = vdwg.mxu0
        %v471 = vmax.f32 %v340, %v433
        %v472 = vmax.f32 %v342, %v435
        %v473 = vmax.f32 %v344, %v437
        %v474 = vmax.f32 %v346, %v439
        %v475 = vmax.f32 %v350, %v443
        %v476 = vmax.f32 %v352, %v445
        %v477 = vmax.f32 %v354, %v447
        %v478 = vmax.f32 %v356, %v449
        %v479 = vmax.f32 %v360, %v453
        %v480 = vmax.f32 %v362, %v455
        %v481 = vmax.f32 %v364, %v457
        %v482 = vmax.f32 %v366, %v459
        %v483 = vmax.f32 %v370, %v463
        %v484 = vmax.f32 %v372, %v465
        %v485 = vmax.f32 %v374, %v467
        %v486 = vmax.f32 %v376, %v469
        %s487 = scalar_lea.vmem %s204, 4 [#allocation2]
        %v488 = vld [vmem:[%s487] sm:$0xf]
        %v489 = vld [vmem:[%s487 + $0x8] sm:$0xf]
        %v490 = vld [vmem:[%s487 + $0x10] sm:$0xf]
        %v491 = vld [vmem:[%s487 + $0x18] sm:$0xf]
        %v492 = vld [vmem:[%s487 + $0x20] sm:$0xf]
        %v493 = vld [vmem:[%s487 + $0x28] sm:$0xf]
        %v494 = vld [vmem:[%s487 + $0x30] sm:$0xf]
        %v495 = vld [vmem:[%s487 + $0x38] sm:$0xf]
        %v504 = vunpack.c.l.b16 %v488
        %v505 = vunpack.c.l.b16 %v489
        %v506 = vunpack.c.l.b16 %v490
        %v507 = vunpack.c.l.b16 %v491
        %v508 = vunpack.c.l.b16 %v492
        %v509 = vunpack.c.l.b16 %v493
        %v510 = vunpack.c.l.b16 %v494
        %v511 = vunpack.c.l.b16 %v495
        %v512 = vpack.c.b16 %v505, %v504
        %v513 = vpack.c.b16 %v507, %v506
        %v514 = vpack.c.b16 %v509, %v508
        %v515 = vpack.c.b16 %v511, %v510
        %v517 = vsel %vm292, %v512, 0
        %v520 = vsel %vm292, %v513, 0
        %v523 = vsel %vm292, %v514, 0
        %v526 = vsel %vm292, %v515, 0
        %528 = vmatprep.subr.bf16.mxu0 %v285
        %529 = vmatpush1.bf16.msra.mxu0 %v284
        %530 = vmatprep.subr.bf16.mxu0 %v287
        %531 = vmatpush1.bf16.msra.mxu0 %v286
        %532 = vmatprep.subr.bf16.mxu0 0
        %533 = vmatpush1.bf16.msra.mxu0 0
        %534 = vmatprep.subr.bf16.mxu0 0
        %535 = vmatpush1.bf16.msra.mxu0 0
        %536 = vmatprep.subr.bf16.mxu0 0
        %537 = vmatpush1.bf16.msra.mxu0 0
        %538 = vmatprep.subr.bf16.mxu0 0
        %539 = vmatpush1.bf16.msra.mxu0 0
        %540 = vmatprep.subr.bf16.mxu0 0
        %541 = vmatpush1.bf16.msra.mxu0 0
        %542 = vmatprep.subr.bf16.mxu0 0
        %543 = vmatpush1.bf16.msra.mxu0 0
        %544 = vmatprep.subr.bf16.mxu0 0
        %545 = vmatpush1.bf16.msra.mxu0 0
        %546 = vmatprep.subr.bf16.mxu0 0
        %547 = vmatpush1.bf16.msra.mxu0 0
        %548 = vmatprep.subr.bf16.mxu0 0
        %549 = vmatpush1.bf16.msra.mxu0 0
        %550 = vmatprep.subr.bf16.mxu0 0
        %551 = vmatpush1.bf16.msra.mxu0 0
        %552 = vmatprep.subr.bf16.mxu0 0
        %553 = vmatpush1.bf16.msra.mxu0 0
        %554 = vmatprep.subr.bf16.mxu0 0
        %555 = vmatpush1.bf16.msra.mxu0 0
        %556 = vmatprep.subr.bf16.mxu0 0
        %557 = vmatpush1.bf16.msra.mxu0 0
        %558 = vmatprep.subr.bf16.mxu0 0
        %559 = vmatpush1.bf16.msra.mxu0 0
        %560 = vmatprep.mubr.bf16.mxu0 0
        %561 = vmatmul.mubr.bf16.gmra.mrb[0].mxu0 %v517
        %v562 = vpop.f32.mrb[0].mxu0
        %v563 = vadd.f32 0.0, %v562
        %v564 = vpop.f32.mrb[0].mxu0
        %v565 = vadd.f32 0.0, %v564
        %v566 = vpop.f32.mrb[0].mxu0
        %v567 = vadd.f32 0.0, %v566
        %v568 = vpop.f32.mrb[0].mxu0
        %v569 = vadd.f32 0.0, %v568
        %570 = vmatprep.mubr.bf16.mxu0 0
        %571 = vmatmul.mubr.bf16.gmra.mrb[0].mxu0 %v520
        %v572 = vpop.f32.mrb[0].mxu0
        %v573 = vadd.f32 0.0, %v572
        %v574 = vpop.f32.mrb[0].mxu0
        %v575 = vadd.f32 0.0, %v574
        %v576 = vpop.f32.mrb[0].mxu0
        %v577 = vadd.f32 0.0, %v576
        %v578 = vpop.f32.mrb[0].mxu0
        %v579 = vadd.f32 0.0, %v578
        %580 = vmatprep.mubr.bf16.mxu0 0
        %581 = vmatmul.mubr.bf16.gmra.mrb[0].mxu0 %v523
        %v582 = vpop.f32.mrb[0].mxu0
        %v583 = vadd.f32 0.0, %v582
        %v584 = vpop.f32.mrb[0].mxu0
        %v585 = vadd.f32 0.0, %v584
        %v586 = vpop.f32.mrb[0].mxu0
        %v587 = vadd.f32 0.0, %v586
        %v588 = vpop.f32.mrb[0].mxu0
        %v589 = vadd.f32 0.0, %v588
        %590 = vmatprep.mubr.bf16.mxu0 0
        %591 = vmatmul.mubr.bf16.gmra.mrb[0].mxu0 %v526
        %v592 = vpop.f32.mrb[0].mxu0
        %v593 = vadd.f32 0.0, %v592
        %v594 = vpop.f32.mrb[0].mxu0
        %v595 = vadd.f32 0.0, %v594
        %v596 = vpop.f32.mrb[0].mxu0
        %v597 = vadd.f32 0.0, %v596
        %v598 = vpop.f32.mrb[0].mxu0
        %v599 = vadd.f32 0.0, %v598
        %600 = vdwg.mxu0
        %v601 = vmax.f32 %v471, %v563
        %v602 = vmax.f32 %v472, %v565
        %v603 = vmax.f32 %v473, %v567
        %v604 = vmax.f32 %v474, %v569
        %v605 = vmax.f32 %v475, %v573
        %v606 = vmax.f32 %v476, %v575
        %v607 = vmax.f32 %v477, %v577
        %v608 = vmax.f32 %v478, %v579
        %v609 = vmax.f32 %v479, %v583
        %v610 = vmax.f32 %v480, %v585
        %v611 = vmax.f32 %v481, %v587
        %v612 = vmax.f32 %v482, %v589
        %v613 = vmax.f32 %v483, %v593
        %v614 = vmax.f32 %v484, %v595
        %v615 = vmax.f32 %v485, %v597
        %v616 = vmax.f32 %v486, %v599
        %617 = vrot.lane.b32.xlu0 %v512, 96
        %v618 = vpop.permute.xlu0 %617
        %619 = vrot.lane.b32.xlu0 %v513, 96
        %v620 = vpop.permute.xlu0 %619
        %621 = vrot.lane.b32.xlu0 %v514, 96
        %v622 = vpop.permute.xlu0 %621
        %623 = vrot.lane.b32.xlu0 %v515, 96
        %v624 = vpop.permute.xlu0 %623
        %v626 = vsel %vm292, %v618, 0
        %v629 = vsel %vm292, %v620, 0
        %v632 = vsel %vm292, %v622, 0
        %v635 = vsel %vm292, %v624, 0
        %637 = vmatprep.subr.bf16.mxu0 %v285
        %638 = vmatpush1.bf16.msra.mxu0 %v284
        %639 = vmatprep.subr.bf16.mxu0 %v287
        %640 = vmatpush1.bf16.msra.mxu0 %v286
        %641 = vmatprep.subr.bf16.mxu0 0
        %642 = vmatpush1.bf16.msra.mxu0 0
        %643 = vmatprep.subr.bf16.mxu0 0
        %644 = vmatpush1.bf16.msra.mxu0 0
        %645 = vmatprep.subr.bf16.mxu0 0
        %646 = vmatpush1.bf16.msra.mxu0 0
        %647 = vmatprep.subr.bf16.mxu0 0
        %648 = vmatpush1.bf16.msra.mxu0 0
        %649 = vmatprep.subr.bf16.mxu0 0
        %650 = vmatpush1.bf16.msra.mxu0 0
        %651 = vmatprep.subr.bf16.mxu0 0
        %652 = vmatpush1.bf16.msra.mxu0 0
        %653 = vmatprep.subr.bf16.mxu0 0
        %654 = vmatpush1.bf16.msra.mxu0 0
        %655 = vmatprep.subr.bf16.mxu0 0
        %656 = vmatpush1.bf16.msra.mxu0 0
        %657 = vmatprep.subr.bf16.mxu0 0
        %658 = vmatpush1.bf16.msra.mxu0 0
        %659 = vmatprep.subr.bf16.mxu0 0
        %660 = vmatpush1.bf16.msra.mxu0 0
        %661 = vmatprep.subr.bf16.mxu0 0
        %662 = vmatpush1.bf16.msra.mxu0 0
        %663 = vmatprep.subr.bf16.mxu0 0
        %664 = vmatpush1.bf16.msra.mxu0 0
        %665 = vmatprep.subr.bf16.mxu0 0
        %666 = vmatpush1.bf16.msra.mxu0 0
        %667 = vmatprep.subr.bf16.mxu0 0
        %668 = vmatpush1.bf16.msra.mxu0 0
        %669 = vmatprep.mubr.bf16.mxu0 0
        %670 = vmatmul.mubr.bf16.gmra.mrb[0].mxu0 %v626
        %v671 = vpop.f32.mrb[0].mxu0
        %v672 = vadd.f32 0.0, %v671
        %v673 = vpop.f32.mrb[0].mxu0
        %v674 = vadd.f32 0.0, %v673
        %v675 = vpop.f32.mrb[0].mxu0
        %v676 = vadd.f32 0.0, %v675
        %v677 = vpop.f32.mrb[0].mxu0
        %v678 = vadd.f32 0.0, %v677
        %679 = vmatprep.mubr.bf16.mxu0 0
        %680 = vmatmul.mubr.bf16.gmra.mrb[0].mxu0 %v629
        %v681 = vpop.f32.mrb[0].mxu0
        %v682 = vadd.f32 0.0, %v681
        %v683 = vpop.f32.mrb[0].mxu0
        %v684 = vadd.f32 0.0, %v683
        %v685 = vpop.f32.mrb[0].mxu0
        %v686 = vadd.f32 0.0, %v685
        %v687 = vpop.f32.mrb[0].mxu0
        %v688 = vadd.f32 0.0, %v687
        %689 = vmatprep.mubr.bf16.mxu0 0
        %690 = vmatmul.mubr.bf16.gmra.mrb[0].mxu0 %v632
        %v691 = vpop.f32.mrb[0].mxu0
        %v692 = vadd.f32 0.0, %v691
        %v693 = vpop.f32.mrb[0].mxu0
        %v694 = vadd.f32 0.0, %v693
        %v695 = vpop.f32.mrb[0].mxu0
        %v696 = vadd.f32 0.0, %v695
        %v697 = vpop.f32.mrb[0].mxu0
        %v698 = vadd.f32 0.0, %v697
        %699 = vmatprep.mubr.bf16.mxu0 0
        %700 = vmatmul.mubr.bf16.gmra.mrb[0].mxu0 %v635
        %v701 = vpop.f32.mrb[0].mxu0
        %v702 = vadd.f32 0.0, %v701
        %v703 = vpop.f32.mrb[0].mxu0
        %v704 = vadd.f32 0.0, %v703
        %v705 = vpop.f32.mrb[0].mxu0
        %v706 = vadd.f32 0.0, %v705
        %v707 = vpop.f32.mrb[0].mxu0
        %v708 = vadd.f32 0.0, %v707
        %709 = vdwg.mxu0
        %v710 = vmax.f32 %v601, %v672
        %v711 = vmax.f32 %v602, %v674
        %v712 = vmax.f32 %v603, %v676
        %v713 = vmax.f32 %v604, %v678
        %v714 = vmax.f32 %v605, %v682
        %v715 = vmax.f32 %v606, %v684
        %v716 = vmax.f32 %v607, %v686
        %v717 = vmax.f32 %v608, %v688
        %v718 = vmax.f32 %v609, %v692
        %v719 = vmax.f32 %v610, %v694
        %v720 = vmax.f32 %v611, %v696
        %v721 = vmax.f32 %v612, %v698
        %v722 = vmax.f32 %v613, %v702
        %v723 = vmax.f32 %v614, %v704
        %v724 = vmax.f32 %v615, %v706
        %v725 = vmax.f32 %v616, %v708
        %v726 = vpack.c.bf16 %v712, %v710
        %v727 = vpack.c.bf16 %v716, %v714
        %v728 = vpack.c.bf16 %v720, %v718
        %v729 = vpack.c.bf16 %v724, %v722
        %v734 = vunpack.c.l.b16 %v726
        %v735 = vunpack.c.h.b16 %v726
        %v736 = vunpack.c.l.b16 %v727
        %v737 = vunpack.c.h.b16 %v727
        %v738 = vunpack.c.l.b16 %v728
        %v739 = vunpack.c.h.b16 %v728
        %v740 = vunpack.c.l.b16 %v729
        %v741 = vunpack.c.h.b16 %v729
        %v742 = vpack.c.b16 %v734, %v734
        %v743 = vpack.c.b16 %v735, %v735
        %v744 = vpack.c.b16 %v736, %v736
        %v745 = vpack.c.b16 %v737, %v737
        %v746 = vpack.c.b16 %v738, %v738
        %v747 = vpack.c.b16 %v739, %v739
        %v748 = vpack.c.b16 %v740, %v740
        %v749 = vpack.c.b16 %v741, %v741
        %758 = vst [vmem:[%s228] sm:$0xf] %v742
        %759 = vst [vmem:[%s228 + $0x4] sm:$0xf] %v743
        %760 = vst [vmem:[%s228 + $0x8] sm:$0xf] %v744
        %761 = vst [vmem:[%s228 + $0xc] sm:$0xf] %v745
        %762 = vst [vmem:[%s228 + $0x10] sm:$0xf] %v746
        %763 = vst [vmem:[%s228 + $0x14] sm:$0xf] %v747
        %764 = vst [vmem:[%s228 + $0x18] sm:$0xf] %v748
        %765 = vst [vmem:[%s228 + $0x1c] sm:$0xf] %v749
        %v766 = vpack.c.bf16 %v713, %v711
        %v767 = vpack.c.bf16 %v717, %v715
        %v768 = vpack.c.bf16 %v721, %v719
        %v769 = vpack.c.bf16 %v725, %v723
        %v774 = vunpack.c.l.b16 %v766
        %v775 = vunpack.c.h.b16 %v766
        %v776 = vunpack.c.l.b16 %v767
        %v777 = vunpack.c.h.b16 %v767
        %v778 = vunpack.c.l.b16 %v768
        %v779 = vunpack.c.h.b16 %v768
        %v780 = vunpack.c.l.b16 %v769
        %v781 = vunpack.c.h.b16 %v769
        %v782 = vpack.c.b16 %v774, %v774
        %v783 = vpack.c.b16 %v775, %v775
        %v784 = vpack.c.b16 %v776, %v776
        %v785 = vpack.c.b16 %v777, %v777
        %v786 = vpack.c.b16 %v778, %v778
        %v787 = vpack.c.b16 %v779, %v779
        %v788 = vpack.c.b16 %v780, %v780
        %v789 = vpack.c.b16 %v781, %v781
        %798 = vst [vmem:[%s235] sm:$0xf] %v782
        %799 = vst [vmem:[%s235 + $0x4] sm:$0xf] %v783
        %800 = vst [vmem:[%s235 + $0x8] sm:$0xf] %v784
        %801 = vst [vmem:[%s235 + $0xc] sm:$0xf] %v785
        %802 = vst [vmem:[%s235 + $0x10] sm:$0xf] %v786
        %803 = vst [vmem:[%s235 + $0x14] sm:$0xf] %v787
        %804 = vst [vmem:[%s235 + $0x18] sm:$0xf] %v788
        %805 = vst [vmem:[%s235 + $0x1c] sm:$0xf] %v789
        %s806 = sand.u32 %s96, 1
        %s807 = scalar_lea.sflag [#allocation4], %s806
        %s808 = sand.u32 %s96, 1
        %s809 = smul.addr %s808, 32
        %s810 = scalar_lea.vmem [#allocation7], %s809
        %s811 = sand.u32 %s124, 1
        %s812 = scalar_lea.sflag [#allocation9], %s811
        %s813 = sand.u32 %s124, 1
        %s814 = smul.addr %s813, 32
        %s815 = scalar_lea.vmem [#allocation8], %s814
        // Predicated region
        $region37: #{tpu_custom_call.1} parent=27 // pred_check
          %p816 = pneg %p106
        $region38: #{tpu_custom_call.1} parent=27 // pred_check_branch
          %818 = sbr.rel (%p816) target = $region40
        $region39: #{tpu_custom_call.1} parent=27 // pred_region
          %s819 = smul.u32 8, %s30
          %s821 = ssub.s32 512, 512
          %822 = vsyncadd %s807, %s821
          %s823 = smul.addr %s29, 8
          %s824 = sadd.s32 %s819, %s823
          %s825 = smul.addr %s824, 64
          %s826 = scalar_lea.hbm %s2, %s825
          %s827 = sshll.u32 %s810, 4
          %s828 = int_to_ptr.vmem [resolvable:$true] %s827
          %833 = dma.vmem_to_hbm [thread:$0]  %s828, 512, %s826, %s807, 64, 64, 4
        $region40: #{tpu_custom_call.1} parent=27 // pred_fallthru
          _
        // Predicated region
        $region41: #{tpu_custom_call.1} parent=27 // pred_check
          %p834 = pneg %p134
        $region42: #{tpu_custom_call.1} parent=27 // pred_check_branch
          %836 = sbr.rel (%p834) target = $region44
        $region43: #{tpu_custom_call.1} parent=27 // pred_region
          %s837 = smul.u32 8, %s30
          %s839 = ssub.s32 512, 512
          %840 = vsyncadd %s812, %s839
          %s841 = smul.addr %s29, 8
          %s842 = sadd.s32 %s837, %s841
          %s843 = smul.addr %s842, 64
          %s844 = scalar_lea.hbm %s3, %s843
          %s845 = sshll.u32 %s815, 4
          %s846 = int_to_ptr.vmem [resolvable:$true] %s845
          %851 = dma.vmem_to_hbm [thread:$0]  %s846, 512, %s844, %s812, 64, 64, 4
        $region44: #{tpu_custom_call.1} parent=27 // pred_fallthru
          _
      $region28: #{tpu_custom_call.1} parent=5 // pred_fallthru
        _
      %p852 = scmp.le.s32.totalorder 2, %s20
      // Predicated region
      $region45: #{tpu_custom_call.1} parent=5 // pred_check
        %p853 = pneg %p852
      $region46: #{tpu_custom_call.1} parent=5 // pred_check_branch
        %855 = sbr.rel (%p853) target = $region48
      $region47: #{tpu_custom_call.1} parent=5 // pred_region
        %s856 = ssub.s32 %s20, 2
        // Predicated region
        $region49: #{tpu_custom_call.1} parent=47 // pred_check
          %p857 = pneg %p112
        $region50: #{tpu_custom_call.1} parent=47 // pred_check_branch
          %859 = sbr.rel (%p857) target = $region52
        $region51: #{tpu_custom_call.1} parent=47 // pred_region
          %s860 = sand.u32 %s97, 1
          %s861 = scalar_lea.sflag [#allocation4], %s860
          %s862 = sand.u32 %s97, 1
          %s863 = smul.addr %s862, 32
          %s864 = scalar_lea.vmem [#allocation7], %s863
          %865 = dma.done %s861, 512
        $region52: #{tpu_custom_call.1} parent=47 // pred_fallthru
          _
        // Predicated region
        $region53: #{tpu_custom_call.1} parent=47 // pred_check
          %p866 = pneg %p140
        $region54: #{tpu_custom_call.1} parent=47 // pred_check_branch
          %868 = sbr.rel (%p866) target = $region56
        $region55: #{tpu_custom_call.1} parent=47 // pred_region
          %s869 = sand.u32 %s125, 1
          %s870 = scalar_lea.sflag [#allocation9], %s869
          %s871 = sand.u32 %s125, 1
          %s872 = smul.addr %s871, 32
          %s873 = scalar_lea.vmem [#allocation8], %s872
          %874 = dma.done %s870, 512
        $region56: #{tpu_custom_call.1} parent=47 // pred_fallthru
          _
      $region48: #{tpu_custom_call.1} parent=5 // pred_fallthru
        _
    $region6: #{tpu_custom_call.1} parent=1 // loop_footer
      %s24 = sadd.s32 1, %s20
    $region7: #{tpu_custom_call.1} parent=1 // loop_footer_branch
      %19 = sbr.rel target = $region3
    $region8: #{tpu_custom_call.1} parent=1 // loop_exit
      _
    %875 = vsyncpa [#allocation3], 1
    %s876 = scalar_lea.sflag [#allocation3], 1
    %877 = vsyncpa %s876, 1
    %878 = vsyncpa [#allocation6], 1
    %879 = vsyncpa [#allocation4], 1
    %s880 = scalar_lea.sflag [#allocation4], 1
    %881 = vsyncpa %s880, 1
    %882 = vsyncpa [#allocation9], 1
    %s883 = scalar_lea.sflag [#allocation9], 1
    %884 = vsyncpa %s883, 1

</llo_original>
